<compile_context>
chip_gen: v7x
topology: tpu7x:2x2x1
jax: 0.10.0
libtpu: 0.0.40
codegen_flags: <defaults>
</compile_context>

<pallas_src>
import jax
import jax.numpy as jnp
from jax.experimental import pallas as pl
from jax.experimental.pallas import tpu as pltpu

_LANE = 128


def _sublane_multiple(dtype):
    itemsize = jnp.dtype(dtype).itemsize
    return max(8, 32 // max(1, itemsize))   # 8 for f32, 16 for bf16, 32 for int8/fp8


def _make_l1_partial_kernel(tile_m, chunk):
    n_chunks = tile_m // chunk

    def kernel(nrows_ref, a_ref, b_ref, out_ref):
        base = pl.program_id(0) * tile_m
        nrows = nrows_ref[0]
        # Hoisted sublane iota (JAX does not CSE broadcast_in_dim in loops).
        row_iota = jax.lax.broadcasted_iota(jnp.int32, (chunk, _LANE), 0)

        def body(g, acc):
            off = pl.multiple_of(g * chunk, chunk)
            a = a_ref[pl.ds(off, chunk), :].astype(jnp.float32)
            b = b_ref[pl.ds(off, chunk), :].astype(jnp.float32)
            d = jnp.abs(a - b)
            # Zero rows past the true end of the data (ragged last tile).
            valid = (base + off + row_iota) < nrows
            return acc + jnp.where(valid, d, 0.0)

        acc = jax.lax.fori_loop(
            0, n_chunks, body,
            jnp.zeros((chunk, _LANE), jnp.float32),
            unroll=min(8, n_chunks),
        )
        out_ref[0] = acc

    return kernel


def _l1_mean(a, b, *, tile_rows=4096):
    assert a.shape == b.shape, (a.shape, b.shape)
    total = a.size
    cdt = jnp.promote_types(a.dtype, b.dtype)
    a = a.astype(cdt)
    b = b.astype(cdt)
    chunk = _sublane_multiple(cdt)

    af = a.reshape(-1)
    bf = b.reshape(-1)
    rem = total % _LANE
    if rem:
        # Rare path (numel not a multiple of 128): pad < 128 zeros purely so a
        # dense (rows, 128) lane view exists; |0-0| adds nothing to the sum.
        # TODO(synk): avoid even this copy with a manual-DMA (pl.ANY) tail path.
        pad = _LANE - rem
        af = jnp.pad(af, (0, pad))
        bf = jnp.pad(bf, (0, pad))
    rows = af.size // _LANE
    a2 = af.reshape(rows, _LANE)
    b2 = bf.reshape(rows, _LANE)

    # Tile size: as large as sensible (amortizes per-step overhead; v7x HBM is
    # fast enough that small tiles expose it), capped by VMEM budget.
    tile_m = min(tile_rows, rows)
    tile_m = max(chunk, ((tile_m + chunk - 1) // chunk) * chunk)
    # Guarantee >= 2 grid steps whenever the data allows it so the "parallel"
    # grid axis actually shards across both TensorCores on v7x.
    if rows > chunk and rows <= tile_m:
        half = -(-rows // 2)
        tile_m = max(chunk, ((half + chunk - 1) // chunk) * chunk)
    num_tiles = -(-rows // tile_m)       # last tile may be ragged -> masked

    itemsize = jnp.dtype(cdt).itemsize
    cost = pl.CostEstimate(
        flops=2 * total,
        transcendentals=0,
        bytes_accessed=2 * rows * _LANE * itemsize + num_tiles * chunk * _LANE * 4,
    )

    nrows_arr = jnp.array([rows], dtype=jnp.int32)

    partials = pl.pallas_call(
        _make_l1_partial_kernel(tile_m, chunk),
        out_shape=jax.ShapeDtypeStruct((num_tiles, chunk, _LANE), jnp.float32),
        grid_spec=pltpu.PrefetchScalarGridSpec(
            num_scalar_prefetch=1,
            grid=(num_tiles,),
            in_specs=[
                pl.BlockSpec((tile_m, _LANE), lambda i, nrows: (i, 0)),
                pl.BlockSpec((tile_m, _LANE), lambda i, nrows: (i, 0)),
            ],
            out_specs=pl.BlockSpec((1, chunk, _LANE), lambda i, nrows: (i, 0, 0)),
        ),
        compiler_params=pltpu.CompilerParams(
            dimension_semantics=("parallel",),
        ),
        cost_estimate=cost,
    )(nrows_arr, a2, b2)

    # Tiny final reduction + normalization by the TRUE element count.
    return jnp.sum(partials) * jnp.float32(1.0 / total)


def l_intensity(image_visible, image_infrared, image_fused):
    """Pallas TPU implementation of L_Intensity.forward.

    Matches: F.l1_loss(image_infrared, image_fused); image_visible is unused
    by the reference module.
    """
    del image_visible  # unused, exactly as in the PyTorch module
    return _l1_mean(image_infrared, image_fused)


def _reference(image_visible, image_infrared, image_fused):
    del image_visible
    return jnp.mean(jnp.abs(image_infrared.astype(jnp.float32)
                            - image_fused.astype(jnp.float32)))


if __name__ == "__main__":
    key = jax.random.PRNGKey(0)
    k1, k2, k3 = jax.random.split(key, 3)
    N, C, H, W = 2, 4, 16, 16
    image_visible = jax.random.uniform(k1, (N, C, H, W), dtype=jnp.float32)
    image_infrared = jax.random.uniform(k2, (N, C, H, W), dtype=jnp.float32)
    image_fused = jax.random.uniform(k3, (N, C, H, W), dtype=jnp.float32)

    loss = l_intensity(image_visible, image_infrared, image_fused)
    loss = jax.block_until_ready(loss)

    ref = _reference(image_visible, image_infrared, image_fused)
    assert jnp.allclose(loss, ref, rtol=1e-5, atol=1e-6), (loss, ref)
    print("KERNEL_OK")
</pallas_src>

<mosaic_0001>
module attributes {stable_mosaic.version = 11 : i64} {
  func.func @kernel(%arg0: i32, %arg1: memref<1xi32, #tpu.memory_space<smem>>, %arg2: memref<8x128xf32, #tpu.memory_space<vmem>>, %arg3: memref<8x128xf32, #tpu.memory_space<vmem>>, %arg4: memref<1x8x128xf32, #tpu.memory_space<vmem>>) attributes {dimension_semantics = [#tpu.dimension_semantics<parallel>], iteration_bounds = array<i64: 2>, scalar_prefetch = 1 : i64, scratch_operands = 0 : i64, tpu.core_type = #tpu.core_type<tc>, window_params = [{transform_indices = @transform_0, window_bounds = array<i64: 8, 128>}, {transform_indices = @transform_1, window_bounds = array<i64: 8, 128>}, {transform_indices = @transform_2, window_bounds = array<i64: 1, 8, 128>}]} {
    %c8_i32 = arith.constant 8 : i32
    %0 = arith.muli %arg0, %c8_i32 : i32
    %c0 = arith.constant 0 : index
    %1 = memref.load %arg1[%c0] : memref<1xi32, #tpu.memory_space<smem>>
    %2 = tpu.iota {dimensions = array<i32: 0>} : vector<8x128xi32>
    %cst = arith.constant 0.000000e+00 : f32
    %3 = vector.broadcast %cst : f32 to vector<8x128xf32>
    %c0_i32 = arith.constant 0 : i32
    %c8_i32_0 = arith.constant 8 : i32
    %4 = arith.muli %c0_i32, %c8_i32_0 : i32
    %5 = tpu.assume_multiple %4, 8 : i32
    %6 = arith.index_cast %5 : i32 to index
    %c0_1 = arith.constant 0 : index
    %7 = vector.load %arg2[%6, %c0_1] : memref<8x128xf32, #tpu.memory_space<vmem>>, vector<8x128xf32>
    %8 = arith.index_cast %5 : i32 to index
    %c0_2 = arith.constant 0 : index
    %9 = vector.load %arg3[%8, %c0_2] : memref<8x128xf32, #tpu.memory_space<vmem>>, vector<8x128xf32>
    %10 = arith.subf %7, %9 : vector<8x128xf32>
    %11 = math.absf %10 : vector<8x128xf32>
    %12 = arith.addi %0, %5 : i32
    %13 = vector.broadcast %12 : i32 to vector<8x128xi32>
    %14 = arith.addi %13, %2 : vector<8x128xi32>
    %15 = vector.broadcast %1 : i32 to vector<8x128xi32>
    %16 = arith.cmpi slt, %14, %15 : vector<8x128xi32>
    %cst_3 = arith.constant 0.000000e+00 : f32
    %17 = vector.broadcast %cst_3 : f32 to vector<8x128xf32>
    %18 = arith.select %16, %11, %17 : vector<8x128xi1>, vector<8x128xf32>
    %19 = arith.addf %3, %18 : vector<8x128xf32>
    %c1_i32 = arith.constant 1 : i32
    %c0_4 = arith.constant 0 : index
    %c0_5 = arith.constant 0 : index
    %c0_6 = arith.constant 0 : index
    %20 = vector.load %arg4[%c0_4, %c0_5, %c0_6] : memref<1x8x128xf32, #tpu.memory_space<vmem>>, vector<1x8x128xf32>
    %21 = vector.shape_cast %20 : vector<1x8x128xf32> to vector<8x128xf32>
    %22 = vector.shape_cast %19 : vector<8x128xf32> to vector<1x8x128xf32>
    tpu.vector_store %arg4[%c0_4, %c0_5, %c0_6], %22 {strides = array<i32>} : memref<1x8x128xf32, #tpu.memory_space<vmem>>, vector<1x8x128xf32>,
    return
  }
  func.func @transform_0(%arg0: i32, %arg1: memref<1xi32, #tpu.memory_space<smem>>) -> (i32, i32) {
    %c0_i32 = arith.constant 0 : i32
    %c0_i32_0 = arith.constant 0 : i32
    return %arg0, %c0_i32 : i32, i32
  }
  func.func @transform_1(%arg0: i32, %arg1: memref<1xi32, #tpu.memory_space<smem>>) -> (i32, i32) {
    %c0_i32 = arith.constant 0 : i32
    %c0_i32_0 = arith.constant 0 : i32
    return %arg0, %c0_i32 : i32, i32
  }
  func.func @transform_2(%arg0: i32, %arg1: memref<1xi32, #tpu.memory_space<smem>>) -> (i32, i32, i32) {
    %c0_i32 = arith.constant 0 : i32
    %c0_i32_0 = arith.constant 0 : i32
    %c0_i32_1 = arith.constant 0 : i32
    return %arg0, %c0_i32, %c0_i32_0 : i32, i32, i32
  }
}

</mosaic_0001>

<llo_original>
// kernel: tpu_custom_call.1
$region0: #{tpu_custom_call.1}
  #allocation0 [shape = 'u32[]', space=smem, size = 0x4, offset = 0x4, fixed_abs, tag = 'smem constant byte address 0x4 - core index']
  #allocation1 [shape = 'u32[144,128]{1,0:T(1,128)}', space=vmem, size = 0x12000, scoped, tag = 'internal scratch']
  #allocation2 [shape = 's32[1]{0}', space=sflag, size = 0x4, scoped, tag = 'scoped memory for tpu_custom_call.1']
  #allocation3 [shape = 's32[1]{0:T(128)S(6)}', space=smem, size = 0x200, scoped, tag = 'prefetched SMEM operand 0']
  %s0 = inlined_call_operand.<no memory space> [shape: s32[1], index: 0, kind: input, shape index: {}]
  %s1 = inlined_call_operand.hbm [shape: f32[16,128], index: 1, kind: input, shape index: {}]
  %s2 = inlined_call_operand.hbm [shape: f32[16,128], index: 2, kind: input, shape index: {}]
  %s3 = inlined_call_operand.hbm [shape: f32[2,8,128], index: 3, kind: output, shape index: {}]
  %s4 = sld [smem:[#allocation0]]
  $region49: #{tpu_custom_call.1} parent=0
    _
  %s6 = ssub.s32 1, %s4
  %s7 = scalar_select 0, %s6, %s4
  %8 = sst [smem:[#allocation3]] %s0
  $region1: #{tpu_custom_call.1} parent=0
    #allocation4 [shape = 'u8[8192]{0}', space=vmem, size = 0x2000, scoped, tag = 'input window, operand 1']
    #allocation5 [shape = 's32[2]{0}', space=sflag, size = 0x8, scoped, tag = 'scoped memory for tpu_custom_call.1']
    #allocation6 [shape = 's32[2]{0}', space=sflag, size = 0x8, scoped, tag = 'scoped memory for tpu_custom_call.1']
    #allocation7 [shape = 'u8[8192]{0}', space=vmem, size = 0x2000, scoped, tag = 'input window, operand 2']
    #allocation8 [shape = 's32[2]{0}', space=sflag, size = 0x8, scoped, tag = 'scoped memory for tpu_custom_call.1']
    #allocation9 [shape = 'u8[8192]{0}', space=vmem, size = 0x2000, scoped, tag = 'output window, operand 0']
    %9 = vsyncpa [#allocation5], 0
    %s10 = scalar_lea.sflag [#allocation5], 1
    %11 = vsyncpa %s10, 0
    %12 = vsyncpa [#allocation8], 0
    %s13 = scalar_lea.sflag [#allocation8], 1
    %14 = vsyncpa %s13, 0
    %15 = vsyncpa [#allocation6], 0
    %s16 = scalar_lea.sflag [#allocation6], 1
    %17 = vsyncpa %s16, 0
    loop: start=0, step=1, limit=4
    $region2: #{tpu_custom_call.1} parent=1 // loop_pre_header
      _
    $region3: #{tpu_custom_call.1} parent=1 // loop_header
      %s19 = sphi 0, %s23
      %p20 = scmp.ge.s32.totalorder %s19, 4
      %s29 = sphi 0, %s31
      %s32 = sphi 0, %s29
      %s33 = sphi 0, %s32
      %s49 = sphi 0, %s33
      %s55 = sphi 0, %s57
      %s58 = sphi 0, %s55
      %s59 = sphi 0, %s58
      %s75 = sphi 0, %s59
      %s81 = sphi 0, %s83
      %s84 = sphi 0, %s81
      %s85 = sphi 0, %s84
      %s101 = sphi 0, %s85
    $region4: #{tpu_custom_call.1} parent=1 // loop_header_branch
      %22 = sbr.rel (%p20) target = $region8
    $region5: #{tpu_custom_call.1} parent=1 // loop_body
      %s24 = ssub.s32 %s19, 1
      %s25 = ssub.s32 %s19, 2
      %s26 = sadd.s32 %s19, 1
      %s27 = ssub.s32 %s19, %s26
      %p28 = scmp.eq.s32.totalorder %s27, 0
      %s30 = sadd.s32 %s29, 1
      %s31 = scalar_select %p28, %s29, %s30
      %p34 = pneg %p28
      %p35 = scmp.eq.s32.totalorder %s19, 1
      %p36 = por %p34, %p35
      %p37 = scmp.ne.s32.totalorder %s29, %s32
      %p38 = scmp.eq.s32.totalorder %s19, 0
      %p39 = por %p37, %p38
      %p40 = scmp.ne.s32.totalorder %s29, %s32
      %p41 = scmp.eq.s32.totalorder %s24, 1
      %p42 = por %p40, %p41
      %p43 = scmp.ne.s32.totalorder %s32, %s33
      %p44 = scmp.eq.s32.totalorder %s24, 0
      %p45 = por %p43, %p44
      %p46 = scmp.ne.s32.totalorder %s32, %s33
      %p47 = scmp.eq.s32.totalorder %s25, 1
      %p48 = por %p46, %p47
      %p50 = scmp.ne.s32.totalorder %s33, %s49
      %p51 = scmp.eq.s32.totalorder %s25, 0
      %p52 = por %p50, %p51
      %s53 = ssub.s32 %s19, %s26
      %p54 = scmp.eq.s32.totalorder %s53, 0
      %s56 = sadd.s32 %s55, 1
      %s57 = scalar_select %p54, %s55, %s56
      %p60 = pneg %p54
      %p61 = scmp.eq.s32.totalorder %s19, 1
      %p62 = por %p60, %p61
      %p63 = scmp.ne.s32.totalorder %s55, %s58
      %p64 = scmp.eq.s32.totalorder %s19, 0
      %p65 = por %p63, %p64
      %p66 = scmp.ne.s32.totalorder %s55, %s58
      %p67 = scmp.eq.s32.totalorder %s24, 1
      %p68 = por %p66, %p67
      %p69 = scmp.ne.s32.totalorder %s58, %s59
      %p70 = scmp.eq.s32.totalorder %s24, 0
      %p71 = por %p69, %p70
      %p72 = scmp.ne.s32.totalorder %s58, %s59
      %p73 = scmp.eq.s32.totalorder %s25, 1
      %p74 = por %p72, %p73
      %p76 = scmp.ne.s32.totalorder %s59, %s75
      %p77 = scmp.eq.s32.totalorder %s25, 0
      %p78 = por %p76, %p77
      %s79 = ssub.s32 %s19, %s26
      %p80 = scmp.eq.s32.totalorder %s79, 0
      %s82 = sadd.s32 %s81, 1
      %s83 = scalar_select %p80, %s81, %s82
      %p86 = pneg %p80
      %p87 = scmp.eq.s32.totalorder %s19, 1
      %p88 = por %p86, %p87
      %p89 = scmp.ne.s32.totalorder %s81, %s84
      %p90 = scmp.eq.s32.totalorder %s19, 0
      %p91 = por %p89, %p90
      %p92 = scmp.ne.s32.totalorder %s81, %s84
      %p93 = scmp.eq.s32.totalorder %s24, 1
      %p94 = por %p92, %p93
      %p95 = scmp.ne.s32.totalorder %s84, %s85
      %p96 = scmp.eq.s32.totalorder %s24, 0
      %p97 = por %p95, %p96
      %p98 = scmp.ne.s32.totalorder %s84, %s85
      %p99 = scmp.eq.s32.totalorder %s25, 1
      %p100 = por %p98, %p99
      %p102 = scmp.ne.s32.totalorder %s85, %s101
      %p103 = scmp.eq.s32.totalorder %s25, 0
      %p104 = por %p102, %p103
      %p105 = scmp.le.s32.totalorder 1, %s19
      %p106 = scmp.lt.s32.totalorder %s19, 3
      %p107 = pnand %p105, %p106
      %p108 = pneg %p107
      // Predicated region
      $region9: #{tpu_custom_call.1} parent=5 // pred_check
        _
      $region10: #{tpu_custom_call.1} parent=5 // pred_check_branch
        %110 = sbr.rel (%p107) target = $region12
      $region11: #{tpu_custom_call.1} parent=5 // pred_region
        %s111 = ssub.s32 %s19, 1
      $region12: #{tpu_custom_call.1} parent=5 // pred_fallthru
        _
      %p112 = scmp.lt.s32.totalorder %s19, 2
      // Predicated region
      $region13: #{tpu_custom_call.1} parent=5 // pred_check
        %p113 = pneg %p112
      $region14: #{tpu_custom_call.1} parent=5 // pred_check_branch
        %115 = sbr.rel (%p113) target = $region16
      $region15: #{tpu_custom_call.1} parent=5 // pred_region
        // Predicated region
        $region17: #{tpu_custom_call.1} parent=15 // pred_check
          %p116 = pneg %p39
        $region18: #{tpu_custom_call.1} parent=15 // pred_check_branch
          %118 = sbr.rel (%p116) target = $region20
        $region19: #{tpu_custom_call.1} parent=15 // pred_region
          %s119 = sand.u32 %s29, 1
          %s120 = scalar_lea.sflag [#allocation5], %s119
          %s121 = sand.u32 %s29, 1
          %s122 = smul.addr %s121, 8
          %s123 = scalar_lea.vmem [#allocation4], %s122
          %s125 = ssub.s32 128, 128
          %126 = vsyncadd %s120, %s125
          %s127 = smul.addr %s19, 128
          %s128 = scalar_lea.hbm %s1, %s127
          %s130 = sshll.u32 %s123, 4
          %s131 = int_to_ptr.vmem [resolvable:$true] %s130
          %133 = dma.hbm_to_vmem [thread:$0]  %s128, 128, %s131, %s120
        $region20: #{tpu_custom_call.1} parent=15 // pred_fallthru
          _
        // Predicated region
        $region21: #{tpu_custom_call.1} parent=15 // pred_check
          %p134 = pneg %p65
        $region22: #{tpu_custom_call.1} parent=15 // pred_check_branch
          %136 = sbr.rel (%p134) target = $region24
        $region23: #{tpu_custom_call.1} parent=15 // pred_region
          %s137 = sand.u32 %s55, 1
          %s138 = scalar_lea.sflag [#allocation8], %s137
          %s139 = sand.u32 %s55, 1
          %s140 = smul.addr %s139, 8
          %s141 = scalar_lea.vmem [#allocation7], %s140
          %s143 = ssub.s32 128, 128
          %144 = vsyncadd %s138, %s143
          %s145 = smul.addr %s19, 128
          %s146 = scalar_lea.hbm %s2, %s145
          %s148 = sshll.u32 %s141, 4
          %s149 = int_to_ptr.vmem [resolvable:$true] %s148
          %151 = dma.hbm_to_vmem [thread:$0]  %s146, 128, %s149, %s138
        $region24: #{tpu_custom_call.1} parent=15 // pred_fallthru
          _
      $region16: #{tpu_custom_call.1} parent=5 // pred_fallthru
        _
      %p152 = scmp.le.s32.totalorder 1, %s19
      %p153 = scmp.lt.s32.totalorder %s19, 3
      %p154 = pnand %p152, %p153
      %p155 = pneg %p154
      // Predicated region
      $region25: #{tpu_custom_call.1} parent=5 // pred_check
        _
      $region26: #{tpu_custom_call.1} parent=5 // pred_check_branch
        %157 = sbr.rel (%p154) target = $region28
      $region27: #{tpu_custom_call.1} parent=5 // pred_region
        %s158 = ssub.s32 %s19, 1
        %s159 = sand.u32 %s32, 1
        %s160 = scalar_lea.sflag [#allocation5], %s159
        %s161 = sand.u32 %s32, 1
        %s162 = smul.addr %s161, 8
        %s163 = scalar_lea.vmem [#allocation4], %s162
        // Predicated region
        $region29: #{tpu_custom_call.1} parent=27 // pred_check
          %p164 = pneg %p45
        $region30: #{tpu_custom_call.1} parent=27 // pred_check_branch
          %166 = sbr.rel (%p164) target = $region32
        $region31: #{tpu_custom_call.1} parent=27 // pred_region
          %167 = dma.done %s160, 128
        $region32: #{tpu_custom_call.1} parent=27 // pred_fallthru
          _
        %s168 = sand.u32 %s58, 1
        %s169 = scalar_lea.sflag [#allocation8], %s168
        %s170 = sand.u32 %s58, 1
        %s171 = smul.addr %s170, 8
        %s172 = scalar_lea.vmem [#allocation7], %s171
        // Predicated region
        $region33: #{tpu_custom_call.1} parent=27 // pred_check
          %p173 = pneg %p71
        $region34: #{tpu_custom_call.1} parent=27 // pred_check_branch
          %175 = sbr.rel (%p173) target = $region36
        $region35: #{tpu_custom_call.1} parent=27 // pred_region
          %176 = dma.done %s169, 128
        $region36: #{tpu_custom_call.1} parent=27 // pred_fallthru
          _
        %s177 = sand.u32 %s32, 1
        %s178 = scalar_lea.sflag [#allocation5], %s177
        %s179 = sand.u32 %s32, 1
        %s180 = smul.addr %s179, 8
        %s181 = scalar_lea.vmem [#allocation4], %s180
        %p182 = pneg %p45
        %p183 = pneg %p42
        %s184 = sand.u32 %s58, 1
        %s185 = scalar_lea.sflag [#allocation8], %s184
        %s186 = sand.u32 %s58, 1
        %s187 = smul.addr %s186, 8
        %s188 = scalar_lea.vmem [#allocation7], %s187
        %p189 = pneg %p71
        %p190 = pneg %p68
        %p191 = pneg %p97
        %p192 = pneg %p94
        %s193 = sand.u32 %s84, 1
        %s194 = scalar_lea.sflag [#allocation6], %s193
        %s195 = sand.u32 %s84, 1
        %s196 = smul.addr %s195, 8
        %s197 = scalar_lea.vmem [#allocation9], %s196
        %s198 = smul.u32 %s24, 8
        %s199 = sld [smem:[#allocation3]]
        %v200 = vlaneseq
        %v201 = vshrl.u32 %v200, 7
        %v202 = vld [vmem:[%s163] sm:$0xff]
        %v203 = vld [vmem:[%s172] sm:$0xff]
        %v204 = vsub.f32 %v202, %v203
        %v205 = vand.u32 2147483647, %v204
        %s206 = sadd.s32 %s198, 0
        %v207 = vstv %s206
        %v208 = vadd.s32 %v207, %v201
        %v209 = vstv %s199
        %vm210 = vcmp.lt.s32.totalorder %v208, %v209
        %v211 = vsel %vm210, %v205, 0.0
        %v212 = vadd.f32 %v211, 0.0
        %213 = vst [vmem:[%s197] sm:$0xff] %v212
        %s214 = sand.u32 %s84, 1
        %s215 = scalar_lea.sflag [#allocation6], %s214
        %s216 = sand.u32 %s84, 1
        %s217 = smul.addr %s216, 8
        %s218 = scalar_lea.vmem [#allocation9], %s217
        // Predicated region
        $region37: #{tpu_custom_call.1} parent=27 // pred_check
          %p219 = pneg %p94
        $region38: #{tpu_custom_call.1} parent=27 // pred_check_branch
          %221 = sbr.rel (%p219) target = $region40
        $region39: #{tpu_custom_call.1} parent=27 // pred_region
          %s223 = ssub.s32 128, 128
          %224 = vsyncadd %s215, %s223
          %s225 = smul.addr %s24, 128
          %s226 = scalar_lea.hbm %s3, %s225
          %s228 = sshll.u32 %s218, 4
          %s229 = int_to_ptr.vmem [resolvable:$true] %s228
          %231 = dma.vmem_to_hbm [thread:$0]  %s229, 128, %s226, %s215
        $region40: #{tpu_custom_call.1} parent=27 // pred_fallthru
          _
      $region28: #{tpu_custom_call.1} parent=5 // pred_fallthru
        _
      %p232 = scmp.le.s32.totalorder 2, %s19
      // Predicated region
      $region41: #{tpu_custom_call.1} parent=5 // pred_check
        %p233 = pneg %p232
      $region42: #{tpu_custom_call.1} parent=5 // pred_check_branch
        %235 = sbr.rel (%p233) target = $region44
      $region43: #{tpu_custom_call.1} parent=5 // pred_region
        %s236 = ssub.s32 %s19, 2
        // Predicated region
        $region45: #{tpu_custom_call.1} parent=43 // pred_check
          %p237 = pneg %p100
        $region46: #{tpu_custom_call.1} parent=43 // pred_check_branch
          %239 = sbr.rel (%p237) target = $region48
        $region47: #{tpu_custom_call.1} parent=43 // pred_region
          %s240 = sand.u32 %s85, 1
          %s241 = scalar_lea.sflag [#allocation6], %s240
          %s242 = sand.u32 %s85, 1
          %s243 = smul.addr %s242, 8
          %s244 = scalar_lea.vmem [#allocation9], %s243
          %245 = dma.done %s241, 128
        $region48: #{tpu_custom_call.1} parent=43 // pred_fallthru
          _
      $region44: #{tpu_custom_call.1} parent=5 // pred_fallthru
        _
    $region6: #{tpu_custom_call.1} parent=1 // loop_footer
      %s23 = sadd.s32 1, %s19
    $region7: #{tpu_custom_call.1} parent=1 // loop_footer_branch
      %18 = sbr.rel target = $region3
    $region8: #{tpu_custom_call.1} parent=1 // loop_exit
      _
    %246 = vsyncpa [#allocation5], 1
    %s247 = scalar_lea.sflag [#allocation5], 1
    %248 = vsyncpa %s247, 1
    %249 = vsyncpa [#allocation8], 1
    %s250 = scalar_lea.sflag [#allocation8], 1
    %251 = vsyncpa %s250, 1
    %252 = vsyncpa [#allocation6], 1
    %s253 = scalar_lea.sflag [#allocation6], 1
    %254 = vsyncpa %s253, 1

</llo_original>
